<compile_context>
chip_gen: v5e
topology: v5e:2x2
jax: 0.10.0
libtpu: 0.0.40
codegen_flags: <defaults>
</compile_context>

<pallas_src>
import numpy as np
import jax
import jax.numpy as jnp
from jax.experimental import pallas as pl
from jax.experimental.pallas import tpu as pltpu

LANES = 128     # candidate lanes per vreg row
SUBL = 8        # sublanes per vreg / per kernel sub-tile
_INV_SQRT_2PI = 0.3989422804014327
_SQRT_2_OVER_PI = 0.7978845608028654


# --------------------------------------------------------------------------
# Pallas kernel: per-candidate disulfide energy.
# Inputs:  params (SMEM, 40 scalars), bonds (15, TP, 128) VMEM block
#          (plane = bond*3 + xyz component, sublane x lane = candidate).
# Output:  (TP, 128) per-candidate energies (lane-dense, unmasked stores).
# --------------------------------------------------------------------------
def _disulfide_kernel(params_ref, bonds_ref, e_ref):
    # ---- scalar parameters (SMEM) -----------------------------------------
    d_loc      = params_ref[0]
    d_shape    = params_ref[2]
    a_logA     = params_ref[3]
    a_kappa    = params_ref[4]
    dss_logA1  = params_ref[6]
    dss_kappa1 = params_ref[7]
    dss_logA2  = params_ref[9]
    dss_kappa2 = params_ref[10]
    dcs_logA1  = params_ref[12]
    dcs_kappa1 = params_ref[14]
    dcs_logA2  = params_ref[15]
    dcs_kappa2 = params_ref[17]
    dcs_logA3  = params_ref[18]
    dcs_kappa3 = params_ref[20]
    wt_dih_ss  = params_ref[21]
    wt_dih_cs  = params_ref[22]
    wt_ang     = params_ref[23]
    wt_len     = params_ref[24]
    shift      = params_ref[25]
    # host-precomputed trig / reciprocals
    cos_a_mu, cos_dss_mu1, cos_dss_mu2 = params_ref[26], params_ref[27], params_ref[28]
    cos_dcs_mu1, cos_dcs_mu2, cos_dcs_mu3 = params_ref[29], params_ref[30], params_ref[31]
    sin_a_mu, sin_dss_mu1, sin_dss_mu2 = params_ref[32], params_ref[33], params_ref[34]
    sin_dcs_mu1, sin_dcs_mu2, sin_dcs_mu3 = params_ref[35], params_ref[36], params_ref[37]
    inv_scale  = params_ref[38]
    norm_const = params_ref[39]

    n_sub = bonds_ref.shape[1] // SUBL   # static: block sublanes / 8

    def dot3(a, b):
        return a[0] * b[0] + a[1] * b[1] + a[2] * b[2]

    def cross3(a, b):
        return (a[1] * b[2] - a[2] * b[1],
                a[2] * b[0] - a[0] * b[2],
                a[0] * b[1] - a[1] * b[0])

    def inv_norm(sq):
        return jax.lax.rsqrt(jnp.maximum(sq, 1e-12))

    def mixture3(cos_x, sin_x):
        f1 = jnp.exp(dcs_logA1 + dcs_kappa1 * (cos_x * cos_dcs_mu1 + sin_x * sin_dcs_mu1))
        f2 = jnp.exp(dcs_logA2 + dcs_kappa2 * (cos_x * cos_dcs_mu2 + sin_x * sin_dcs_mu2))
        f3 = jnp.exp(dcs_logA3 + dcs_kappa3 * (cos_x * cos_dcs_mu3 + sin_x * sin_dcs_mu3))
        return -jnp.log(jnp.maximum(f1 + f2 + f3, 1e-30))

    def sub_tile(s):
        start = s * SUBL   # static (the sub-tile loop is fully unrolled)

        def bond(b):
            return (bonds_ref[3 * b + 0, pl.ds(start, SUBL), :],
                    bonds_ref[3 * b + 1, pl.ds(start, SUBL), :],
                    bonds_ref[3 * b + 2, pl.ds(start, SUBL), :])

        # v1=CBi-CAi, v2=SGi-CBi, v3=SGj-SGi, v4=CBj-SGj, v5=CAj-CBj
        v2, v3, v4 = bond(1), bond(2), bond(3)
        n2_sq, n3_sq, n4_sq = dot3(v2, v2), dot3(v3, v3), dot3(v4, v4)
        inv_n2, inv_n3, inv_n4 = inv_norm(n2_sq), inv_norm(n3_sq), inv_norm(n4_sq)

        c23, c34 = cross3(v2, v3), cross3(v3, v4)
        nc23_sq, nc34_sq = dot3(c23, c23), dot3(c34, c34)
        inv_nc23, inv_nc34 = inv_norm(nc23_sq), inv_norm(nc34_sq)

        # ---- SG-SG distance: skew-normal negative log-likelihood ----------
        d_ss = n3_sq * inv_n3
        z = (d_ss - d_loc) * inv_scale
        t = d_shape * z
        phi_cdf = 0.5 * (1.0 + jnp.tanh(_SQRT_2_OVER_PI * (t + 0.044715 * t * t * t)))
        score_len = 0.5 * z * z - jnp.log(jnp.maximum(phi_cdf * norm_const, 1e-30))

        # ---- CB-SG-SG angles: single von Mises each ------------------------
        inv_23 = inv_n2 * inv_n3
        inv_34 = inv_n3 * inv_n4
        cos_ai = -dot3(v2, v3) * inv_23
        sin_ai = (nc23_sq * inv_nc23) * inv_23
        cos_aj = -dot3(v3, v4) * inv_34
        sin_aj = (nc34_sq * inv_nc34) * inv_34
        vm_ai = cos_ai * cos_a_mu + sin_ai * sin_a_mu
        vm_aj = cos_aj * cos_a_mu + sin_aj * sin_a_mu
        score_ang = (-2.0 * a_logA) - a_kappa * (vm_ai + vm_aj)

        # ---- CB-SG-SG-CB dihedral: 2-component von Mises mixture -----------
        inv_ss = inv_nc23 * inv_nc34
        cos_ss = dot3(c23, c34) * inv_ss
        sin_ss = dot3(cross3(c23, v3), c34) * (inv_n3 * inv_ss)
        e1 = jnp.exp(dss_logA1 + dss_kappa1 * (cos_ss * cos_dss_mu1 + sin_ss * sin_dss_mu1))
        e2 = jnp.exp(dss_logA2 + dss_kappa2 * (cos_ss * cos_dss_mu2 + sin_ss * sin_dss_mu2))
        score_dih_ss = -jnp.log(jnp.maximum(e1 + e2, 1e-30))

        # ---- CA-CB-SG-SG dihedrals: 3-component mixtures, both sides --------
        # side i (loads v1 late so its vregs die right after c12)
        v1 = bond(0)
        c12 = cross3(v1, v2)
        inv_nc12 = inv_norm(dot3(c12, c12))
        inv_csi = inv_nc12 * inv_nc23
        cos_csi = dot3(c12, c23) * inv_csi
        sin_csi = dot3(cross3(c12, v2), c23) * (inv_n2 * inv_csi)
        score_cs = mixture3(cos_csi, sin_csi)

        # side j
        v5 = bond(4)
        c54 = cross3(v5, v4)
        inv_nc54 = inv_norm(dot3(c54, c54))
        inv_csj = inv_nc54 * inv_nc34
        cos_csj = -dot3(c54, c34) * inv_csj
        sin_csj = dot3(cross3(c54, v4), c34) * (inv_n4 * inv_csj)
        score_cs = score_cs + mixture3(cos_csj, sin_csj)

        total = (wt_dih_ss * score_dih_ss
                 + wt_dih_cs * score_cs
                 + wt_ang * score_ang
                 + wt_len * score_len
                 + shift)
        e_ref[pl.ds(start, SUBL), :] = total

    # Fully-unrolled static sub-tile loop (n_sub <= 8): each iteration works on
    # a single (8, 128) vreg per plane and ends with a store, bounding live
    # ranges so the whole chain stays in the 64-vreg file.
    for s in range(n_sub):
        sub_tile(s)


# --------------------------------------------------------------------------
# JAX glue: find disulfide-connected block pairs, compact to <= K per pose,
# and gather the six atoms of each winning candidate.
# --------------------------------------------------------------------------
def _gather_candidates(coords, block_coord_offset, block_types,
                       inter_block_connections, bt_disulfide_conns,
                       bt_atom_downstream_of_conn, max_dslf_per_pose=None):
    P, B = block_types.shape
    if max_dslf_per_pose is None:
        # exact upper bound: each disulfide is counted once, from its lower
        # block, and uses two distinct blocks -> at most B//2 per pose.
        max_dslf_per_pose = max(1, B // 2)
    K = int(min(max_dslf_per_pose, B))

    pp = jnp.arange(P)[:, None]
    bb = jnp.arange(B)[None, :]

    # cheap dense int work over (P, B): connection topology only, no coords
    bt_i = block_types
    bt_i_safe = jnp.maximum(bt_i, 0)
    dconn_i = jnp.where(bt_i >= 0, bt_disulfide_conns[bt_i_safe], -1)
    has_d = dconn_i >= 0
    dconn_i_safe = jnp.where(has_d, dconn_i, 0)

    conn_info = inter_block_connections[pp, bb, dconn_i_safe]        # (P, B, 2)
    j = conn_info[..., 0]
    jconn = conn_info[..., 1]
    j_safe = jnp.maximum(j, 0)

    bt_j = block_types[pp, j_safe]
    bt_j_safe = jnp.maximum(bt_j, 0)
    dconn_j = bt_disulfide_conns[bt_j_safe]

    # each disulfide counted once, from the lower-index block
    is_dslf = (has_d & (j >= 0) & (bt_j >= 0)
               & (dconn_j >= 0) & (jconn == dconn_j) & (j > bb))

    # ---- compact: keep at most K candidate blocks per pose ------------------
    vals, blk = jax.lax.top_k(is_dslf.astype(jnp.int32), K)          # (P, K)
    valid = vals > 0
    ppk = jnp.arange(P)[:, None]

    j_c = j_safe[ppk, blk]                                           # (P, K)
    dconn_i_c = dconn_i_safe[ppk, blk]
    jconn_c = jnp.where(valid, jconn[ppk, blk], 0)
    bt_i_c = bt_i_safe[ppk, blk]
    bt_j_c = bt_j_safe[ppk, blk]

    # atom-downstream-of-conn order: [conn atom (SG), parent (CB), grandparent (CA)]
    atoms_i = bt_atom_downstream_of_conn[bt_i_c, dconn_i_c]          # (P, K, 3)
    atoms_j = bt_atom_downstream_of_conn[bt_j_c, jconn_c]

    idx_i = block_coord_offset[ppk, blk][..., None] + atoms_i
    idx_j = block_coord_offset[ppk, j_c][..., None] + atoms_j
    idx_i = jnp.where(valid[..., None], idx_i, 0)
    idx_j = jnp.where(valid[..., None], idx_j, 0)

    # expensive coordinate gather only touches the compacted winners
    xyz_i = coords[ppk[..., None], idx_i]                            # (P, K, 3, 3)
    xyz_j = coords[ppk[..., None], idx_j]

    # atom order for the kernel: CA_i, CB_i, SG_i, SG_j, CB_j, CA_j
    six = jnp.stack([xyz_i[..., 2, :], xyz_i[..., 1, :], xyz_i[..., 0, :],
                     xyz_j[..., 0, :], xyz_j[..., 1, :], xyz_j[..., 2, :]],
                    axis=2)                                          # (P, K, 6, 3)
    return six, valid, blk, j_c


def _extend_params(global_params):
    """Append host-precomputed cos/sin(mu), 1/d_scale and the skew-normal
    normalization constant to the 26 raw parameters (total 40 scalars)."""
    p = global_params.reshape(-1).astype(jnp.float32)
    mus = p[jnp.array([5, 8, 11, 13, 16, 19])]       # a_mu, dss_mu1/2, dcs_mu1/2/3
    inv_scale = 1.0 / p[1]
    extra = jnp.concatenate([
        jnp.cos(mus), jnp.sin(mus),
        jnp.stack([inv_scale, 2.0 * _INV_SQRT_2PI * inv_scale]),
    ])
    return jnp.concatenate([p, extra])


def _choose_tp(S):
    """Sublanes per grid step.  Large enough to amortize the ~0.35us per-step
    cost (several (8,128) sub-tiles per step), small enough that (a) the grid
    keeps >=2 'parallel' steps when there is work (v7x megacore) and (b) the
    double-buffered (15, TP, 128) f32 block stays < 1 MiB, safe for v5e's
    16 MiB scoped-VMEM default and v7x's 64 MiB physical VMEM."""
    if S <= SUBL:
        return SUBL
    return int(min(64, max(SUBL, (S // 2) // SUBL * SUBL)))


# --------------------------------------------------------------------------
# Top-level wrapper == DisulfideWholePoseScoringModule.forward
# --------------------------------------------------------------------------
def disulfide_pose_scores(coords, pose_stack_block_coord_offset,
                          pose_stack_block_types,
                          pose_stack_inter_block_connections,
                          bt_disulfide_conns, bt_atom_downstream_of_conn,
                          global_params, output_block_pair_energies=False,
                          max_dslf_per_pose=None):
    coords = coords.astype(jnp.float32)
    six, valid, blk_i, blk_j = _gather_candidates(
        coords, pose_stack_block_coord_offset, pose_stack_block_types,
        pose_stack_inter_block_connections, bt_disulfide_conns,
        bt_atom_downstream_of_conn, max_dslf_per_pose)

    P, K = valid.shape
    B = pose_stack_block_types.shape[1]

    # 5 bond vectors per candidate (consecutive atom differences); zeroed on
    # invalid/padded lanes so the in-kernel clamps keep everything finite.
    bonds = six[:, :, 1:, :] - six[:, :, :-1, :]                     # (P, K, 5, 3)
    bonds = jnp.where(valid[..., None, None], bonds, 0.0)

    # flatten candidates -> (15, S_pad, 128) lane/sublane-dense slab.  After
    # compaction these arrays are tiny, so the transpose/pad copies are cheap.
    C = P * K
    n_rows = -(-C // LANES)
    S = -(-n_rows // SUBL) * SUBL
    TP = _choose_tp(S)
    S_pad = -(-S // TP) * TP

    flat = bonds.reshape(C, 15)
    flat = jnp.pad(flat, ((0, S_pad * LANES - C), (0, 0)))
    bonds_k = flat.T.reshape(15, S_pad, LANES)                       # (15, S_pad, 128)
    params = _extend_params(global_params)                           # (40,)

    e_flat = pl.pallas_call(
        _disulfide_kernel,
        out_shape=jax.ShapeDtypeStruct((S_pad, LANES), jnp.float32),
        grid=(S_pad // TP,),
        in_specs=[
            pl.BlockSpec(memory_space=pltpu.SMEM),                   # params
            pl.BlockSpec((15, TP, LANES), lambda g: (0, g, 0)),      # bond planes
        ],
        out_specs=pl.BlockSpec((TP, LANES), lambda g: (g, 0)),       # per-candidate
        compiler_params=pltpu.CompilerParams(
            dimension_semantics=("parallel",)),
    )(params, bonds_k)

    e_cand = e_flat.reshape(-1)[:C].reshape(P, K)
    e_cand = jnp.where(valid, e_cand, 0.0)   # select, not multiply (NaN-safe)

    if output_block_pair_energies:
        # TODO(synk): block-pair assignment convention assumed: full pair
        # energy placed at [lower_block, upper_block].
        pp = jnp.broadcast_to(jnp.arange(P)[:, None], (P, K))
        out = jnp.zeros((1, P, B, B), jnp.float32)
        out = out.at[0, pp, blk_i, blk_j].add(e_cand)
        return out
    return jnp.sum(e_cand, axis=1)[None, :]                          # (1, P)


# --------------------------------------------------------------------------
# Pure-JAX reference for the kernel math (correctness check)
# --------------------------------------------------------------------------
def _ref_candidate_scores(six, mask, global_params):
    prm = [global_params.reshape(-1)[k].astype(jnp.float32) for k in range(26)]
    (d_loc, d_scale, d_shape, a_logA, a_kappa, a_mu,
     dss_logA1, dss_kappa1, dss_mu1, dss_logA2, dss_kappa2, dss_mu2,
     dcs_logA1, dcs_mu1, dcs_kappa1, dcs_logA2, dcs_mu2, dcs_kappa2,
     dcs_logA3, dcs_mu3, dcs_kappa3,
     wt_dih_ss, wt_dih_cs, wt_ang, wt_len, shift) = prm

    CAi, CBi, SGi, SGj, CBj, CAj = [six[..., k, :] for k in range(6)]

    def dot(a, b):
        return jnp.sum(a * b, axis=-1)

    def norm(a):
        return jnp.sqrt(jnp.maximum(dot(a, a), 1e-12))

    def cos_sin_angle(p0, p1, p2):
        u, v = p0 - p1, p2 - p1
        den = jnp.maximum(norm(u) * norm(v), 1e-12)
        return dot(u, v) / den, norm(jnp.cross(u, v)) / den

    def cos_sin_dihedral(p0, p1, p2, p3):
        b0, b1, b2 = p1 - p0, p2 - p1, p3 - p2
        n1, n2 = jnp.cross(b0, b1), jnp.cross(b1, b2)
        den = jnp.maximum(norm(n1) * norm(n2), 1e-12)
        b1u = b1 / norm(b1)[..., None]
        m1 = jnp.cross(n1, b1u)
        return dot(n1, n2) / den, dot(m1, n2) / den

    def vm_cos(c, s, mu):
        return c * jnp.cos(mu) + s * jnp.sin(mu)

    d_ss = norm(SGi - SGj)
    z = (d_ss - d_loc) / d_scale
    t = d_shape * z
    phi_cdf = 0.5 * (1.0 + jnp.tanh(_SQRT_2_OVER_PI * (t + 0.044715 * t ** 3)))
    score_len = 0.5 * z * z - jnp.log(
        jnp.maximum(phi_cdf * (2.0 * _INV_SQRT_2PI) / d_scale, 1e-30))

    ca, sa = cos_sin_angle(CBi, SGi, SGj)
    cb, sb = cos_sin_angle(CBj, SGj, SGi)
    score_ang = (-(a_logA + a_kappa * vm_cos(ca, sa, a_mu))
                 - (a_logA + a_kappa * vm_cos(cb, sb, a_mu)))

    css, sss = cos_sin_dihedral(CBi, SGi, SGj, CBj)
    score_dih_ss = -jnp.log(jnp.maximum(
        jnp.exp(dss_logA1 + dss_kappa1 * vm_cos(css, sss, dss_mu1))
        + jnp.exp(dss_logA2 + dss_kappa2 * vm_cos(css, sss, dss_mu2)), 1e-30))

    def mixture3(c, s):
        return -jnp.log(jnp.maximum(
            jnp.exp(dcs_logA1 + dcs_kappa1 * vm_cos(c, s, dcs_mu1))
            + jnp.exp(dcs_logA2 + dcs_kappa2 * vm_cos(c, s, dcs_mu2))
            + jnp.exp(dcs_logA3 + dcs_kappa3 * vm_cos(c, s, dcs_mu3)), 1e-30))

    c1, s1 = cos_sin_dihedral(CAi, CBi, SGi, SGj)
    c2, s2 = cos_sin_dihedral(CAj, CBj, SGj, SGi)
    score_dih_cs = mixture3(c1, s1) + mixture3(c2, s2)

    total = (wt_dih_ss * score_dih_ss + wt_dih_cs * score_dih_cs
             + wt_ang * score_ang + wt_len * score_len + shift)
    return jnp.where(mask > 0.5, total, 0.0)


# --------------------------------------------------------------------------
if __name__ == "__main__":
    P, B, APB = 2, 8, 8                      # poses, blocks/pose, atoms/block
    n_atoms = B * APB

    key = jax.random.PRNGKey(0)
    coords = jax.random.normal(key, (P, n_atoms, 3), dtype=jnp.float32)

    block_coord_offset = jnp.asarray(
        np.tile(np.arange(B) * APB, (P, 1)), dtype=jnp.int32)

    # block type 0 = CYD (has disulfide connection at conn index 2), 1 = other
    block_types = jnp.asarray(
        [[1, 0, 1, 1, 0, 1, 1, 1],
         [0, 1, 0, 0, 1, 1, 0, 1]], dtype=jnp.int32)

    ibc = np.full((P, B, 3, 2), -1, dtype=np.int32)
    # pose 0: disulfide between blocks 1 and 4
    ibc[0, 1, 2] = (4, 2); ibc[0, 4, 2] = (1, 2)
    # pose 1: disulfides between blocks (0, 3) and (2, 6)
    ibc[1, 0, 2] = (3, 2); ibc[1, 3, 2] = (0, 2)
    ibc[1, 2, 2] = (6, 2); ibc[1, 6, 2] = (2, 2)
    inter_block_connections = jnp.asarray(ibc)

    bt_disulfide_conns = jnp.asarray([2, -1], dtype=jnp.int32)
    adoc = np.zeros((2, 3, 3), dtype=np.int32)
    adoc[0, 2] = [5, 4, 1]                   # downstream of dslf conn: SG, CB, CA
    bt_atom_downstream_of_conn = jnp.asarray(adoc)

    # 26 global parameters, stacked in the same order as the torch module
    global_params = jnp.asarray([[
        2.02, 0.35, -2.0,                    # d_location, d_scale, d_shape
        1.0, 8.0, 1.82,                      # a_logA, a_kappa, a_mu
        0.8, 4.0, -1.571, 0.5, 4.0, 1.571,   # dss (logA, kappa, mu) x2
        0.6, -1.2, 3.0, 0.4, 1.2, 3.0,       # dcs (logA, mu, kappa) x2
        0.3, 3.0, 2.0,                       # dcs (logA, mu, kappa) #3
        0.51, 0.49, 0.48, 0.47, -2.7,        # wt_dih_ss, wt_dih_cs, wt_ang, wt_len, shift
    ]], dtype=jnp.float32)

    totals = disulfide_pose_scores(
        coords, block_coord_offset, block_types, inter_block_connections,
        bt_disulfide_conns, bt_atom_downstream_of_conn, global_params, False)
    block_pair = disulfide_pose_scores(
        coords, block_coord_offset, block_types, inter_block_connections,
        bt_disulfide_conns, bt_atom_downstream_of_conn, global_params, True)
    jax.block_until_ready(totals)
    jax.block_until_ready(block_pair)

    # reference check of the kernel math on the same compacted candidates
    six, valid, _, _ = _gather_candidates(
        coords, block_coord_offset, block_types, inter_block_connections,
        bt_disulfide_conns, bt_atom_downstream_of_conn)
    ref_cand = _ref_candidate_scores(six, valid.astype(jnp.float32), global_params)
    ref_totals = jnp.sum(ref_cand, axis=1)[None, :]

    np.testing.assert_allclose(np.asarray(totals), np.asarray(ref_totals),
                               rtol=2e-4, atol=2e-4)
    np.testing.assert_allclose(np.asarray(jnp.sum(block_pair, axis=(2, 3))),
                               np.asarray(ref_totals), rtol=2e-4, atol=2e-4)
    print("KERNEL_OK")
</pallas_src>

<mosaic_0001>
module attributes {stable_mosaic.version = 11 : i64} {
  func.func @_disulfide_kernel(%arg0: i32, %arg1: memref<40xf32, #tpu.memory_space<smem>>, %arg2: memref<15x8x128xf32, #tpu.memory_space<vmem>>, %arg3: memref<8x128xf32, #tpu.memory_space<vmem>>) attributes {dimension_semantics = [#tpu.dimension_semantics<parallel>], iteration_bounds = array<i64: 1>, scalar_prefetch = 0 : i64, scratch_operands = 0 : i64, tpu.core_type = #tpu.core_type<tc>, window_params = [{transform_indices = @transform_0, window_bounds = array<i64: 40>}, {transform_indices = @transform_1, window_bounds = array<i64: 15, 8, 128>}, {transform_indices = @transform_2, window_bounds = array<i64: 8, 128>}]} {
    %c0 = arith.constant 0 : index
    %0 = memref.load %arg1[%c0] : memref<40xf32, #tpu.memory_space<smem>>
    %c2 = arith.constant 2 : index
    %1 = memref.load %arg1[%c2] : memref<40xf32, #tpu.memory_space<smem>>
    %c3 = arith.constant 3 : index
    %2 = memref.load %arg1[%c3] : memref<40xf32, #tpu.memory_space<smem>>
    %c4 = arith.constant 4 : index
    %3 = memref.load %arg1[%c4] : memref<40xf32, #tpu.memory_space<smem>>
    %c6 = arith.constant 6 : index
    %4 = memref.load %arg1[%c6] : memref<40xf32, #tpu.memory_space<smem>>
    %c7 = arith.constant 7 : index
    %5 = memref.load %arg1[%c7] : memref<40xf32, #tpu.memory_space<smem>>
    %c9 = arith.constant 9 : index
    %6 = memref.load %arg1[%c9] : memref<40xf32, #tpu.memory_space<smem>>
    %c10 = arith.constant 10 : index
    %7 = memref.load %arg1[%c10] : memref<40xf32, #tpu.memory_space<smem>>
    %c12 = arith.constant 12 : index
    %8 = memref.load %arg1[%c12] : memref<40xf32, #tpu.memory_space<smem>>
    %c14 = arith.constant 14 : index
    %9 = memref.load %arg1[%c14] : memref<40xf32, #tpu.memory_space<smem>>
    %c15 = arith.constant 15 : index
    %10 = memref.load %arg1[%c15] : memref<40xf32, #tpu.memory_space<smem>>
    %c17 = arith.constant 17 : index
    %11 = memref.load %arg1[%c17] : memref<40xf32, #tpu.memory_space<smem>>
    %c18 = arith.constant 18 : index
    %12 = memref.load %arg1[%c18] : memref<40xf32, #tpu.memory_space<smem>>
    %c20 = arith.constant 20 : index
    %13 = memref.load %arg1[%c20] : memref<40xf32, #tpu.memory_space<smem>>
    %c21 = arith.constant 21 : index
    %14 = memref.load %arg1[%c21] : memref<40xf32, #tpu.memory_space<smem>>
    %c22 = arith.constant 22 : index
    %15 = memref.load %arg1[%c22] : memref<40xf32, #tpu.memory_space<smem>>
    %c23 = arith.constant 23 : index
    %16 = memref.load %arg1[%c23] : memref<40xf32, #tpu.memory_space<smem>>
    %c24 = arith.constant 24 : index
    %17 = memref.load %arg1[%c24] : memref<40xf32, #tpu.memory_space<smem>>
    %c25 = arith.constant 25 : index
    %18 = memref.load %arg1[%c25] : memref<40xf32, #tpu.memory_space<smem>>
    %c26 = arith.constant 26 : index
    %19 = memref.load %arg1[%c26] : memref<40xf32, #tpu.memory_space<smem>>
    %c27 = arith.constant 27 : index
    %20 = memref.load %arg1[%c27] : memref<40xf32, #tpu.memory_space<smem>>
    %c28 = arith.constant 28 : index
    %21 = memref.load %arg1[%c28] : memref<40xf32, #tpu.memory_space<smem>>
    %c29 = arith.constant 29 : index
    %22 = memref.load %arg1[%c29] : memref<40xf32, #tpu.memory_space<smem>>
    %c30 = arith.constant 30 : index
    %23 = memref.load %arg1[%c30] : memref<40xf32, #tpu.memory_space<smem>>
    %c31 = arith.constant 31 : index
    %24 = memref.load %arg1[%c31] : memref<40xf32, #tpu.memory_space<smem>>
    %c32 = arith.constant 32 : index
    %25 = memref.load %arg1[%c32] : memref<40xf32, #tpu.memory_space<smem>>
    %c33 = arith.constant 33 : index
    %26 = memref.load %arg1[%c33] : memref<40xf32, #tpu.memory_space<smem>>
    %c34 = arith.constant 34 : index
    %27 = memref.load %arg1[%c34] : memref<40xf32, #tpu.memory_space<smem>>
    %c35 = arith.constant 35 : index
    %28 = memref.load %arg1[%c35] : memref<40xf32, #tpu.memory_space<smem>>
    %c36 = arith.constant 36 : index
    %29 = memref.load %arg1[%c36] : memref<40xf32, #tpu.memory_space<smem>>
    %c37 = arith.constant 37 : index
    %30 = memref.load %arg1[%c37] : memref<40xf32, #tpu.memory_space<smem>>
    %c38 = arith.constant 38 : index
    %31 = memref.load %arg1[%c38] : memref<40xf32, #tpu.memory_space<smem>>
    %c39 = arith.constant 39 : index
    %32 = memref.load %arg1[%c39] : memref<40xf32, #tpu.memory_space<smem>>
    %c3_0 = arith.constant 3 : index
    %c0_1 = arith.constant 0 : index
    %c0_2 = arith.constant 0 : index
    %33 = vector.load %arg2[%c3_0, %c0_1, %c0_2] : memref<15x8x128xf32, #tpu.memory_space<vmem>>, vector<1x8x128xf32>
    %34 = vector.shape_cast %33 : vector<1x8x128xf32> to vector<8x128xf32>
    %c4_3 = arith.constant 4 : index
    %c0_4 = arith.constant 0 : index
    %c0_5 = arith.constant 0 : index
    %35 = vector.load %arg2[%c4_3, %c0_4, %c0_5] : memref<15x8x128xf32, #tpu.memory_space<vmem>>, vector<1x8x128xf32>
    %36 = vector.shape_cast %35 : vector<1x8x128xf32> to vector<8x128xf32>
    %c5 = arith.constant 5 : index
    %c0_6 = arith.constant 0 : index
    %c0_7 = arith.constant 0 : index
    %37 = vector.load %arg2[%c5, %c0_6, %c0_7] : memref<15x8x128xf32, #tpu.memory_space<vmem>>, vector<1x8x128xf32>
    %38 = vector.shape_cast %37 : vector<1x8x128xf32> to vector<8x128xf32>
    %c6_8 = arith.constant 6 : index
    %c0_9 = arith.constant 0 : index
    %c0_10 = arith.constant 0 : index
    %39 = vector.load %arg2[%c6_8, %c0_9, %c0_10] : memref<15x8x128xf32, #tpu.memory_space<vmem>>, vector<1x8x128xf32>
    %40 = vector.shape_cast %39 : vector<1x8x128xf32> to vector<8x128xf32>
    %c7_11 = arith.constant 7 : index
    %c0_12 = arith.constant 0 : index
    %c0_13 = arith.constant 0 : index
    %41 = vector.load %arg2[%c7_11, %c0_12, %c0_13] : memref<15x8x128xf32, #tpu.memory_space<vmem>>, vector<1x8x128xf32>
    %42 = vector.shape_cast %41 : vector<1x8x128xf32> to vector<8x128xf32>
    %c8 = arith.constant 8 : index
    %c0_14 = arith.constant 0 : index
    %c0_15 = arith.constant 0 : index
    %43 = vector.load %arg2[%c8, %c0_14, %c0_15] : memref<15x8x128xf32, #tpu.memory_space<vmem>>, vector<1x8x128xf32>
    %44 = vector.shape_cast %43 : vector<1x8x128xf32> to vector<8x128xf32>
    %c9_16 = arith.constant 9 : index
    %c0_17 = arith.constant 0 : index
    %c0_18 = arith.constant 0 : index
    %45 = vector.load %arg2[%c9_16, %c0_17, %c0_18] : memref<15x8x128xf32, #tpu.memory_space<vmem>>, vector<1x8x128xf32>
    %46 = vector.shape_cast %45 : vector<1x8x128xf32> to vector<8x128xf32>
    %c10_19 = arith.constant 10 : index
    %c0_20 = arith.constant 0 : index
    %c0_21 = arith.constant 0 : index
    %47 = vector.load %arg2[%c10_19, %c0_20, %c0_21] : memref<15x8x128xf32, #tpu.memory_space<vmem>>, vector<1x8x128xf32>
    %48 = vector.shape_cast %47 : vector<1x8x128xf32> to vector<8x128xf32>
    %c11 = arith.constant 11 : index
    %c0_22 = arith.constant 0 : index
    %c0_23 = arith.constant 0 : index
    %49 = vector.load %arg2[%c11, %c0_22, %c0_23] : memref<15x8x128xf32, #tpu.memory_space<vmem>>, vector<1x8x128xf32>
    %50 = vector.shape_cast %49 : vector<1x8x128xf32> to vector<8x128xf32>
    %51 = arith.mulf %34, %34 : vector<8x128xf32>
    %52 = arith.mulf %36, %36 : vector<8x128xf32>
    %53 = arith.addf %51, %52 : vector<8x128xf32>
    %54 = arith.mulf %38, %38 : vector<8x128xf32>
    %55 = arith.addf %53, %54 : vector<8x128xf32>
    %56 = arith.mulf %40, %40 : vector<8x128xf32>
    %57 = arith.mulf %42, %42 : vector<8x128xf32>
    %58 = arith.addf %56, %57 : vector<8x128xf32>
    %59 = arith.mulf %44, %44 : vector<8x128xf32>
    %60 = arith.addf %58, %59 : vector<8x128xf32>
    %61 = arith.mulf %46, %46 : vector<8x128xf32>
    %62 = arith.mulf %48, %48 : vector<8x128xf32>
    %63 = arith.addf %61, %62 : vector<8x128xf32>
    %64 = arith.mulf %50, %50 : vector<8x128xf32>
    %65 = arith.addf %63, %64 : vector<8x128xf32>
    %cst = arith.constant 9.99999996E-13 : f32
    %66 = vector.broadcast %cst : f32 to vector<8x128xf32>
    %67 = arith.maximumf %55, %66 : vector<8x128xf32>
    %68 = math.rsqrt %67 : vector<8x128xf32>
    %cst_24 = arith.constant 9.99999996E-13 : f32
    %69 = vector.broadcast %cst_24 : f32 to vector<8x128xf32>
    %70 = arith.maximumf %60, %69 : vector<8x128xf32>
    %71 = math.rsqrt %70 : vector<8x128xf32>
    %cst_25 = arith.constant 9.99999996E-13 : f32
    %72 = vector.broadcast %cst_25 : f32 to vector<8x128xf32>
    %73 = arith.maximumf %65, %72 : vector<8x128xf32>
    %74 = math.rsqrt %73 : vector<8x128xf32>
    %75 = arith.mulf %36, %44 : vector<8x128xf32>
    %76 = arith.mulf %38, %42 : vector<8x128xf32>
    %77 = arith.subf %75, %76 : vector<8x128xf32>
    %78 = arith.mulf %38, %40 : vector<8x128xf32>
    %79 = arith.mulf %34, %44 : vector<8x128xf32>
    %80 = arith.subf %78, %79 : vector<8x128xf32>
    %81 = arith.mulf %34, %42 : vector<8x128xf32>
    %82 = arith.mulf %36, %40 : vector<8x128xf32>
    %83 = arith.subf %81, %82 : vector<8x128xf32>
    %84 = arith.mulf %42, %50 : vector<8x128xf32>
    %85 = arith.mulf %44, %48 : vector<8x128xf32>
    %86 = arith.subf %84, %85 : vector<8x128xf32>
    %87 = arith.mulf %44, %46 : vector<8x128xf32>
    %88 = arith.mulf %40, %50 : vector<8x128xf32>
    %89 = arith.subf %87, %88 : vector<8x128xf32>
    %90 = arith.mulf %40, %48 : vector<8x128xf32>
    %91 = arith.mulf %42, %46 : vector<8x128xf32>
    %92 = arith.subf %90, %91 : vector<8x128xf32>
    %93 = arith.mulf %77, %77 : vector<8x128xf32>
    %94 = arith.mulf %80, %80 : vector<8x128xf32>
    %95 = arith.addf %93, %94 : vector<8x128xf32>
    %96 = arith.mulf %83, %83 : vector<8x128xf32>
    %97 = arith.addf %95, %96 : vector<8x128xf32>
    %98 = arith.mulf %86, %86 : vector<8x128xf32>
    %99 = arith.mulf %89, %89 : vector<8x128xf32>
    %100 = arith.addf %98, %99 : vector<8x128xf32>
    %101 = arith.mulf %92, %92 : vector<8x128xf32>
    %102 = arith.addf %100, %101 : vector<8x128xf32>
    %cst_26 = arith.constant 9.99999996E-13 : f32
    %103 = vector.broadcast %cst_26 : f32 to vector<8x128xf32>
    %104 = arith.maximumf %97, %103 : vector<8x128xf32>
    %105 = math.rsqrt %104 : vector<8x128xf32>
    %cst_27 = arith.constant 9.99999996E-13 : f32
    %106 = vector.broadcast %cst_27 : f32 to vector<8x128xf32>
    %107 = arith.maximumf %102, %106 : vector<8x128xf32>
    %108 = math.rsqrt %107 : vector<8x128xf32>
    %109 = arith.mulf %60, %71 : vector<8x128xf32>
    %110 = vector.broadcast %0 : f32 to vector<8x128xf32>
    %111 = arith.subf %109, %110 : vector<8x128xf32>
    %112 = vector.broadcast %31 : f32 to vector<8x128xf32>
    %113 = arith.mulf %111, %112 : vector<8x128xf32>
    %114 = vector.broadcast %1 : f32 to vector<8x128xf32>
    %115 = arith.mulf %114, %113 : vector<8x128xf32>
    %cst_28 = arith.constant 4.471500e-02 : f32
    %116 = vector.broadcast %cst_28 : f32 to vector<8x128xf32>
    %117 = arith.mulf %116, %115 : vector<8x128xf32>
    %118 = arith.mulf %117, %115 : vector<8x128xf32>
    %119 = arith.mulf %118, %115 : vector<8x128xf32>
    %120 = arith.addf %115, %119 : vector<8x128xf32>
    %cst_29 = arith.constant 0.797884583 : f32
    %121 = vector.broadcast %cst_29 : f32 to vector<8x128xf32>
    %122 = arith.mulf %121, %120 : vector<8x128xf32>
    %123 = math.tanh %122 : vector<8x128xf32>
    %cst_30 = arith.constant 1.000000e+00 : f32
    %124 = vector.broadcast %cst_30 : f32 to vector<8x128xf32>
    %125 = arith.addf %124, %123 : vector<8x128xf32>
    %cst_31 = arith.constant 5.000000e-01 : f32
    %126 = vector.broadcast %cst_31 : f32 to vector<8x128xf32>
    %127 = arith.mulf %126, %125 : vector<8x128xf32>
    %cst_32 = arith.constant 5.000000e-01 : f32
    %128 = vector.broadcast %cst_32 : f32 to vector<8x128xf32>
    %129 = arith.mulf %128, %113 : vector<8x128xf32>
    %130 = arith.mulf %129, %113 : vector<8x128xf32>
    %131 = vector.broadcast %32 : f32 to vector<8x128xf32>
    %132 = arith.mulf %127, %131 : vector<8x128xf32>
    %cst_33 = arith.constant 1.000000e-30 : f32
    %133 = vector.broadcast %cst_33 : f32 to vector<8x128xf32>
    %134 = arith.maximumf %132, %133 : vector<8x128xf32>
    %135 = math.log %134 : vector<8x128xf32>
    %136 = arith.subf %130, %135 : vector<8x128xf32>
    %137 = arith.mulf %68, %71 : vector<8x128xf32>
    %138 = arith.mulf %71, %74 : vector<8x128xf32>
    %139 = arith.mulf %34, %40 : vector<8x128xf32>
    %140 = arith.mulf %36, %42 : vector<8x128xf32>
    %141 = arith.addf %139, %140 : vector<8x128xf32>
    %142 = arith.mulf %38, %44 : vector<8x128xf32>
    %143 = arith.addf %141, %142 : vector<8x128xf32>
    %cst_34 = arith.constant 0.000000e+00 : f32
    %144 = vector.broadcast %cst_34 : f32 to vector<8x128xf32>
    %145 = arith.subf %144, %143 : vector<8x128xf32>
    %146 = arith.mulf %145, %137 : vector<8x128xf32>
    %147 = arith.mulf %97, %105 : vector<8x128xf32>
    %148 = arith.mulf %147, %137 : vector<8x128xf32>
    %149 = arith.mulf %40, %46 : vector<8x128xf32>
    %150 = arith.mulf %42, %48 : vector<8x128xf32>
    %151 = arith.addf %149, %150 : vector<8x128xf32>
    %152 = arith.mulf %44, %50 : vector<8x128xf32>
    %153 = arith.addf %151, %152 : vector<8x128xf32>
    %cst_35 = arith.constant 0.000000e+00 : f32
    %154 = vector.broadcast %cst_35 : f32 to vector<8x128xf32>
    %155 = arith.subf %154, %153 : vector<8x128xf32>
    %156 = arith.mulf %155, %138 : vector<8x128xf32>
    %157 = arith.mulf %102, %108 : vector<8x128xf32>
    %158 = arith.mulf %157, %138 : vector<8x128xf32>
    %159 = vector.broadcast %19 : f32 to vector<8x128xf32>
    %160 = arith.mulf %146, %159 : vector<8x128xf32>
    %161 = vector.broadcast %25 : f32 to vector<8x128xf32>
    %162 = arith.mulf %148, %161 : vector<8x128xf32>
    %163 = arith.addf %160, %162 : vector<8x128xf32>
    %164 = vector.broadcast %19 : f32 to vector<8x128xf32>
    %165 = arith.mulf %156, %164 : vector<8x128xf32>
    %166 = vector.broadcast %25 : f32 to vector<8x128xf32>
    %167 = arith.mulf %158, %166 : vector<8x128xf32>
    %168 = arith.addf %165, %167 : vector<8x128xf32>
    %cst_36 = arith.constant -2.000000e+00 : f32
    %169 = arith.mulf %cst_36, %2 : f32
    %170 = arith.addf %163, %168 : vector<8x128xf32>
    %171 = vector.broadcast %3 : f32 to vector<8x128xf32>
    %172 = arith.mulf %171, %170 : vector<8x128xf32>
    %173 = vector.broadcast %169 : f32 to vector<8x128xf32>
    %174 = arith.subf %173, %172 : vector<8x128xf32>
    %175 = arith.mulf %105, %108 : vector<8x128xf32>
    %176 = arith.mulf %77, %86 : vector<8x128xf32>
    %177 = arith.mulf %80, %89 : vector<8x128xf32>
    %178 = arith.addf %176, %177 : vector<8x128xf32>
    %179 = arith.mulf %83, %92 : vector<8x128xf32>
    %180 = arith.addf %178, %179 : vector<8x128xf32>
    %181 = arith.mulf %180, %175 : vector<8x128xf32>
    %182 = arith.mulf %80, %44 : vector<8x128xf32>
    %183 = arith.mulf %83, %42 : vector<8x128xf32>
    %184 = arith.subf %182, %183 : vector<8x128xf32>
    %185 = arith.mulf %83, %40 : vector<8x128xf32>
    %186 = arith.mulf %77, %44 : vector<8x128xf32>
    %187 = arith.subf %185, %186 : vector<8x128xf32>
    %188 = arith.mulf %77, %42 : vector<8x128xf32>
    %189 = arith.mulf %80, %40 : vector<8x128xf32>
    %190 = arith.subf %188, %189 : vector<8x128xf32>
    %191 = arith.mulf %184, %86 : vector<8x128xf32>
    %192 = arith.mulf %187, %89 : vector<8x128xf32>
    %193 = arith.addf %191, %192 : vector<8x128xf32>
    %194 = arith.mulf %190, %92 : vector<8x128xf32>
    %195 = arith.addf %193, %194 : vector<8x128xf32>
    %196 = arith.mulf %71, %175 : vector<8x128xf32>
    %197 = arith.mulf %195, %196 : vector<8x128xf32>
    %198 = vector.broadcast %20 : f32 to vector<8x128xf32>
    %199 = arith.mulf %181, %198 : vector<8x128xf32>
    %200 = vector.broadcast %26 : f32 to vector<8x128xf32>
    %201 = arith.mulf %197, %200 : vector<8x128xf32>
    %202 = arith.addf %199, %201 : vector<8x128xf32>
    %203 = vector.broadcast %5 : f32 to vector<8x128xf32>
    %204 = arith.mulf %203, %202 : vector<8x128xf32>
    %205 = vector.broadcast %4 : f32 to vector<8x128xf32>
    %206 = arith.addf %205, %204 : vector<8x128xf32>
    %207 = math.exp %206 : vector<8x128xf32>
    %208 = vector.broadcast %21 : f32 to vector<8x128xf32>
    %209 = arith.mulf %181, %208 : vector<8x128xf32>
    %210 = vector.broadcast %27 : f32 to vector<8x128xf32>
    %211 = arith.mulf %197, %210 : vector<8x128xf32>
    %212 = arith.addf %209, %211 : vector<8x128xf32>
    %213 = vector.broadcast %7 : f32 to vector<8x128xf32>
    %214 = arith.mulf %213, %212 : vector<8x128xf32>
    %215 = vector.broadcast %6 : f32 to vector<8x128xf32>
    %216 = arith.addf %215, %214 : vector<8x128xf32>
    %217 = math.exp %216 : vector<8x128xf32>
    %218 = arith.addf %207, %217 : vector<8x128xf32>
    %cst_37 = arith.constant 1.000000e-30 : f32
    %219 = vector.broadcast %cst_37 : f32 to vector<8x128xf32>
    %220 = arith.maximumf %218, %219 : vector<8x128xf32>
    %221 = math.log %220 : vector<8x128xf32>
    %cst_38 = arith.constant 0.000000e+00 : f32
    %222 = vector.broadcast %cst_38 : f32 to vector<8x128xf32>
    %223 = arith.subf %222, %221 : vector<8x128xf32>
    %c0_39 = arith.constant 0 : index
    %c0_40 = arith.constant 0 : index
    %c0_41 = arith.constant 0 : index
    %224 = vector.load %arg2[%c0_39, %c0_40, %c0_41] : memref<15x8x128xf32, #tpu.memory_space<vmem>>, vector<1x8x128xf32>
    %225 = vector.shape_cast %224 : vector<1x8x128xf32> to vector<8x128xf32>
    %c1 = arith.constant 1 : index
    %c0_42 = arith.constant 0 : index
    %c0_43 = arith.constant 0 : index
    %226 = vector.load %arg2[%c1, %c0_42, %c0_43] : memref<15x8x128xf32, #tpu.memory_space<vmem>>, vector<1x8x128xf32>
    %227 = vector.shape_cast %226 : vector<1x8x128xf32> to vector<8x128xf32>
    %c2_44 = arith.constant 2 : index
    %c0_45 = arith.constant 0 : index
    %c0_46 = arith.constant 0 : index
    %228 = vector.load %arg2[%c2_44, %c0_45, %c0_46] : memref<15x8x128xf32, #tpu.memory_space<vmem>>, vector<1x8x128xf32>
    %229 = vector.shape_cast %228 : vector<1x8x128xf32> to vector<8x128xf32>
    %230 = arith.mulf %227, %38 : vector<8x128xf32>
    %231 = arith.mulf %229, %36 : vector<8x128xf32>
    %232 = arith.subf %230, %231 : vector<8x128xf32>
    %233 = arith.mulf %229, %34 : vector<8x128xf32>
    %234 = arith.mulf %225, %38 : vector<8x128xf32>
    %235 = arith.subf %233, %234 : vector<8x128xf32>
    %236 = arith.mulf %225, %36 : vector<8x128xf32>
    %237 = arith.mulf %227, %34 : vector<8x128xf32>
    %238 = arith.subf %236, %237 : vector<8x128xf32>
    %239 = arith.mulf %232, %232 : vector<8x128xf32>
    %240 = arith.mulf %235, %235 : vector<8x128xf32>
    %241 = arith.addf %239, %240 : vector<8x128xf32>
    %242 = arith.mulf %238, %238 : vector<8x128xf32>
    %243 = arith.addf %241, %242 : vector<8x128xf32>
    %cst_47 = arith.constant 9.99999996E-13 : f32
    %244 = vector.broadcast %cst_47 : f32 to vector<8x128xf32>
    %245 = arith.maximumf %243, %244 : vector<8x128xf32>
    %246 = math.rsqrt %245 : vector<8x128xf32>
    %247 = arith.mulf %246, %105 : vector<8x128xf32>
    %248 = arith.mulf %232, %77 : vector<8x128xf32>
    %249 = arith.mulf %235, %80 : vector<8x128xf32>
    %250 = arith.addf %248, %249 : vector<8x128xf32>
    %251 = arith.mulf %238, %83 : vector<8x128xf32>
    %252 = arith.addf %250, %251 : vector<8x128xf32>
    %253 = arith.mulf %252, %247 : vector<8x128xf32>
    %254 = arith.mulf %235, %38 : vector<8x128xf32>
    %255 = arith.mulf %238, %36 : vector<8x128xf32>
    %256 = arith.subf %254, %255 : vector<8x128xf32>
    %257 = arith.mulf %238, %34 : vector<8x128xf32>
    %258 = arith.mulf %232, %38 : vector<8x128xf32>
    %259 = arith.subf %257, %258 : vector<8x128xf32>
    %260 = arith.mulf %232, %36 : vector<8x128xf32>
    %261 = arith.mulf %235, %34 : vector<8x128xf32>
    %262 = arith.subf %260, %261 : vector<8x128xf32>
    %263 = arith.mulf %256, %77 : vector<8x128xf32>
    %264 = arith.mulf %259, %80 : vector<8x128xf32>
    %265 = arith.addf %263, %264 : vector<8x128xf32>
    %266 = arith.mulf %262, %83 : vector<8x128xf32>
    %267 = arith.addf %265, %266 : vector<8x128xf32>
    %268 = arith.mulf %68, %247 : vector<8x128xf32>
    %269 = arith.mulf %267, %268 : vector<8x128xf32>
    %270 = vector.broadcast %22 : f32 to vector<8x128xf32>
    %271 = arith.mulf %253, %270 : vector<8x128xf32>
    %272 = vector.broadcast %28 : f32 to vector<8x128xf32>
    %273 = arith.mulf %269, %272 : vector<8x128xf32>
    %274 = arith.addf %271, %273 : vector<8x128xf32>
    %275 = vector.broadcast %9 : f32 to vector<8x128xf32>
    %276 = arith.mulf %275, %274 : vector<8x128xf32>
    %277 = vector.broadcast %8 : f32 to vector<8x128xf32>
    %278 = arith.addf %277, %276 : vector<8x128xf32>
    %279 = math.exp %278 : vector<8x128xf32>
    %280 = vector.broadcast %23 : f32 to vector<8x128xf32>
    %281 = arith.mulf %253, %280 : vector<8x128xf32>
    %282 = vector.broadcast %29 : f32 to vector<8x128xf32>
    %283 = arith.mulf %269, %282 : vector<8x128xf32>
    %284 = arith.addf %281, %283 : vector<8x128xf32>
    %285 = vector.broadcast %11 : f32 to vector<8x128xf32>
    %286 = arith.mulf %285, %284 : vector<8x128xf32>
    %287 = vector.broadcast %10 : f32 to vector<8x128xf32>
    %288 = arith.addf %287, %286 : vector<8x128xf32>
    %289 = math.exp %288 : vector<8x128xf32>
    %290 = vector.broadcast %24 : f32 to vector<8x128xf32>
    %291 = arith.mulf %253, %290 : vector<8x128xf32>
    %292 = vector.broadcast %30 : f32 to vector<8x128xf32>
    %293 = arith.mulf %269, %292 : vector<8x128xf32>
    %294 = arith.addf %291, %293 : vector<8x128xf32>
    %295 = vector.broadcast %13 : f32 to vector<8x128xf32>
    %296 = arith.mulf %295, %294 : vector<8x128xf32>
    %297 = vector.broadcast %12 : f32 to vector<8x128xf32>
    %298 = arith.addf %297, %296 : vector<8x128xf32>
    %299 = math.exp %298 : vector<8x128xf32>
    %300 = arith.addf %279, %289 : vector<8x128xf32>
    %301 = arith.addf %300, %299 : vector<8x128xf32>
    %cst_48 = arith.constant 1.000000e-30 : f32
    %302 = vector.broadcast %cst_48 : f32 to vector<8x128xf32>
    %303 = arith.maximumf %301, %302 : vector<8x128xf32>
    %304 = math.log %303 : vector<8x128xf32>
    %cst_49 = arith.constant 0.000000e+00 : f32
    %305 = vector.broadcast %cst_49 : f32 to vector<8x128xf32>
    %306 = arith.subf %305, %304 : vector<8x128xf32>
    %c12_50 = arith.constant 12 : index
    %c0_51 = arith.constant 0 : index
    %c0_52 = arith.constant 0 : index
    %307 = vector.load %arg2[%c12_50, %c0_51, %c0_52] : memref<15x8x128xf32, #tpu.memory_space<vmem>>, vector<1x8x128xf32>
    %308 = vector.shape_cast %307 : vector<1x8x128xf32> to vector<8x128xf32>
    %c13 = arith.constant 13 : index
    %c0_53 = arith.constant 0 : index
    %c0_54 = arith.constant 0 : index
    %309 = vector.load %arg2[%c13, %c0_53, %c0_54] : memref<15x8x128xf32, #tpu.memory_space<vmem>>, vector<1x8x128xf32>
    %310 = vector.shape_cast %309 : vector<1x8x128xf32> to vector<8x128xf32>
    %c14_55 = arith.constant 14 : index
    %c0_56 = arith.constant 0 : index
    %c0_57 = arith.constant 0 : index
    %311 = vector.load %arg2[%c14_55, %c0_56, %c0_57] : memref<15x8x128xf32, #tpu.memory_space<vmem>>, vector<1x8x128xf32>
    %312 = vector.shape_cast %311 : vector<1x8x128xf32> to vector<8x128xf32>
    %313 = arith.mulf %310, %50 : vector<8x128xf32>
    %314 = arith.mulf %312, %48 : vector<8x128xf32>
    %315 = arith.subf %313, %314 : vector<8x128xf32>
    %316 = arith.mulf %312, %46 : vector<8x128xf32>
    %317 = arith.mulf %308, %50 : vector<8x128xf32>
    %318 = arith.subf %316, %317 : vector<8x128xf32>
    %319 = arith.mulf %308, %48 : vector<8x128xf32>
    %320 = arith.mulf %310, %46 : vector<8x128xf32>
    %321 = arith.subf %319, %320 : vector<8x128xf32>
    %322 = arith.mulf %315, %315 : vector<8x128xf32>
    %323 = arith.mulf %318, %318 : vector<8x128xf32>
    %324 = arith.addf %322, %323 : vector<8x128xf32>
    %325 = arith.mulf %321, %321 : vector<8x128xf32>
    %326 = arith.addf %324, %325 : vector<8x128xf32>
    %cst_58 = arith.constant 9.99999996E-13 : f32
    %327 = vector.broadcast %cst_58 : f32 to vector<8x128xf32>
    %328 = arith.maximumf %326, %327 : vector<8x128xf32>
    %329 = math.rsqrt %328 : vector<8x128xf32>
    %330 = arith.mulf %329, %108 : vector<8x128xf32>
    %331 = arith.mulf %315, %86 : vector<8x128xf32>
    %332 = arith.mulf %318, %89 : vector<8x128xf32>
    %333 = arith.addf %331, %332 : vector<8x128xf32>
    %334 = arith.mulf %321, %92 : vector<8x128xf32>
    %335 = arith.addf %333, %334 : vector<8x128xf32>
    %cst_59 = arith.constant 0.000000e+00 : f32
    %336 = vector.broadcast %cst_59 : f32 to vector<8x128xf32>
    %337 = arith.subf %336, %335 : vector<8x128xf32>
    %338 = arith.mulf %337, %330 : vector<8x128xf32>
    %339 = arith.mulf %318, %50 : vector<8x128xf32>
    %340 = arith.mulf %321, %48 : vector<8x128xf32>
    %341 = arith.subf %339, %340 : vector<8x128xf32>
    %342 = arith.mulf %321, %46 : vector<8x128xf32>
    %343 = arith.mulf %315, %50 : vector<8x128xf32>
    %344 = arith.subf %342, %343 : vector<8x128xf32>
    %345 = arith.mulf %315, %48 : vector<8x128xf32>
    %346 = arith.mulf %318, %46 : vector<8x128xf32>
    %347 = arith.subf %345, %346 : vector<8x128xf32>
    %348 = arith.mulf %341, %86 : vector<8x128xf32>
    %349 = arith.mulf %344, %89 : vector<8x128xf32>
    %350 = arith.addf %348, %349 : vector<8x128xf32>
    %351 = arith.mulf %347, %92 : vector<8x128xf32>
    %352 = arith.addf %350, %351 : vector<8x128xf32>
    %353 = arith.mulf %74, %330 : vector<8x128xf32>
    %354 = arith.mulf %352, %353 : vector<8x128xf32>
    %355 = vector.broadcast %22 : f32 to vector<8x128xf32>
    %356 = arith.mulf %338, %355 : vector<8x128xf32>
    %357 = vector.broadcast %28 : f32 to vector<8x128xf32>
    %358 = arith.mulf %354, %357 : vector<8x128xf32>
    %359 = arith.addf %356, %358 : vector<8x128xf32>
    %360 = vector.broadcast %9 : f32 to vector<8x128xf32>
    %361 = arith.mulf %360, %359 : vector<8x128xf32>
    %362 = vector.broadcast %8 : f32 to vector<8x128xf32>
    %363 = arith.addf %362, %361 : vector<8x128xf32>
    %364 = math.exp %363 : vector<8x128xf32>
    %365 = vector.broadcast %23 : f32 to vector<8x128xf32>
    %366 = arith.mulf %338, %365 : vector<8x128xf32>
    %367 = vector.broadcast %29 : f32 to vector<8x128xf32>
    %368 = arith.mulf %354, %367 : vector<8x128xf32>
    %369 = arith.addf %366, %368 : vector<8x128xf32>
    %370 = vector.broadcast %11 : f32 to vector<8x128xf32>
    %371 = arith.mulf %370, %369 : vector<8x128xf32>
    %372 = vector.broadcast %10 : f32 to vector<8x128xf32>
    %373 = arith.addf %372, %371 : vector<8x128xf32>
    %374 = math.exp %373 : vector<8x128xf32>
    %375 = vector.broadcast %24 : f32 to vector<8x128xf32>
    %376 = arith.mulf %338, %375 : vector<8x128xf32>
    %377 = vector.broadcast %30 : f32 to vector<8x128xf32>
    %378 = arith.mulf %354, %377 : vector<8x128xf32>
    %379 = arith.addf %376, %378 : vector<8x128xf32>
    %380 = vector.broadcast %13 : f32 to vector<8x128xf32>
    %381 = arith.mulf %380, %379 : vector<8x128xf32>
    %382 = vector.broadcast %12 : f32 to vector<8x128xf32>
    %383 = arith.addf %382, %381 : vector<8x128xf32>
    %384 = math.exp %383 : vector<8x128xf32>
    %385 = arith.addf %364, %374 : vector<8x128xf32>
    %386 = arith.addf %385, %384 : vector<8x128xf32>
    %cst_60 = arith.constant 1.000000e-30 : f32
    %387 = vector.broadcast %cst_60 : f32 to vector<8x128xf32>
    %388 = arith.maximumf %386, %387 : vector<8x128xf32>
    %389 = math.log %388 : vector<8x128xf32>
    %cst_61 = arith.constant 0.000000e+00 : f32
    %390 = vector.broadcast %cst_61 : f32 to vector<8x128xf32>
    %391 = arith.subf %390, %389 : vector<8x128xf32>
    %392 = arith.addf %306, %391 : vector<8x128xf32>
    %393 = vector.broadcast %14 : f32 to vector<8x128xf32>
    %394 = arith.mulf %393, %223 : vector<8x128xf32>
    %395 = vector.broadcast %15 : f32 to vector<8x128xf32>
    %396 = arith.mulf %395, %392 : vector<8x128xf32>
    %397 = arith.addf %394, %396 : vector<8x128xf32>
    %398 = vector.broadcast %16 : f32 to vector<8x128xf32>
    %399 = arith.mulf %398, %174 : vector<8x128xf32>
    %400 = arith.addf %397, %399 : vector<8x128xf32>
    %401 = vector.broadcast %17 : f32 to vector<8x128xf32>
    %402 = arith.mulf %401, %136 : vector<8x128xf32>
    %403 = arith.addf %400, %402 : vector<8x128xf32>
    %404 = vector.broadcast %18 : f32 to vector<8x128xf32>
    %405 = arith.addf %403, %404 : vector<8x128xf32>
    %c0_62 = arith.constant 0 : index
    %c0_63 = arith.constant 0 : index
    %406 = vector.load %arg3[%c0_62, %c0_63] : memref<8x128xf32, #tpu.memory_space<vmem>>, vector<8x128xf32>
    tpu.vector_store %arg3[%c0_62, %c0_63], %405 {strides = array<i32>} : memref<8x128xf32, #tpu.memory_space<vmem>>, vector<8x128xf32>,
    return
  }
  func.func @transform_0(%arg0: i32) -> i32 {
    %c0_i32 = arith.constant 0 : i32
    %c0_i32_0 = arith.constant 0 : i32
    return %c0_i32 : i32
  }
  func.func @transform_1(%arg0: i32) -> (i32, i32, i32) {
    %c0_i32 = arith.constant 0 : i32
    %c0_i32_0 = arith.constant 0 : i32
    %c0_i32_1 = arith.constant 0 : i32
    return %c0_i32, %arg0, %c0_i32_0 : i32, i32, i32
  }
  func.func @transform_2(%arg0: i32) -> (i32, i32) {
    %c0_i32 = arith.constant 0 : i32
    %c0_i32_0 = arith.constant 0 : i32
    return %arg0, %c0_i32 : i32, i32
  }
}

</mosaic_0001>

<llo_original>
// kernel: tpu_custom_call.1
$region0: #{tpu_custom_call.1}
  #allocation0 [shape = 'u32[]', space=smem, size = 0x4, offset = 0x4, fixed_abs, tag = 'smem constant byte address 0x4 - core index']
  #allocation1 [shape = 'u32[72,128]{1,0:T(1,128)}', space=vmem, size = 0x9000, scoped, tag = 'internal scratch']
  %s0 = inlined_call_operand.hbm [shape: f32[40], index: 0, kind: input, shape index: {}]
  %s1 = inlined_call_operand.hbm [shape: f32[15,8,128], index: 1, kind: input, shape index: {}]
  %s2 = inlined_call_operand.hbm [shape: f32[8,128], index: 2, kind: output, shape index: {}]
  %s3 = sld [smem:[#allocation0]]
  $region26: #{tpu_custom_call.1} parent=0
    _
  %s5 = ssub.s32 1, %s3
  %s6 = scalar_select 0, %s5, %s3
  $region1: #{tpu_custom_call.1} parent=0
    #allocation2 [shape = 'u8[512]{0}', space=smem, size = 0x200, scoped, tag = 'input window, operand 0, single buffered']
    #allocation3 [shape = 's32[1]{0}', space=sflag, size = 0x4, scoped, tag = 'scoped memory for tpu_custom_call.1']
    #allocation4 [shape = 's32[1]{0}', space=sflag, size = 0x4, scoped, tag = 'scoped memory for tpu_custom_call.1']
    #allocation5 [shape = 's32[1]{0}', space=sflag, size = 0x4, scoped, tag = 'scoped memory for tpu_custom_call.1']
    #allocation6 [shape = 'u8[61440]{0}', space=vmem, size = 0xf000, scoped, tag = 'input window, operand 1, single buffered']
    #allocation7 [shape = 'u8[4096]{0}', space=vmem, size = 0x1000, scoped, tag = 'output window, operand 0, single buffered']
    %7 = vsyncpa [#allocation5], 0
    %8 = vsyncpa [#allocation3], 0
    %9 = vsyncpa [#allocation4], 0
    // Predicated region
    $region2: #{tpu_custom_call.1} parent=1 // pred_check
      _
    $region3: #{tpu_custom_call.1} parent=1 // pred_check_branch
      %11 = sbr.rel (0) target = $region5
    $region4: #{tpu_custom_call.1} parent=1 // pred_region
      %13 = vsyncadd [#allocation5], 0
      %s15 = sshll.u32 %s0, 4
      %s16 = int_to_ptr.hbm [resolvable:$true] %s15
      %18 = dma.hbm_to_smem %s16, 16, [#allocation2], [#allocation5]
    $region5: #{tpu_custom_call.1} parent=1 // pred_fallthru
      _
    // Predicated region
    $region6: #{tpu_custom_call.1} parent=1 // pred_check
      _
    $region7: #{tpu_custom_call.1} parent=1 // pred_check_branch
      %20 = sbr.rel (0) target = $region9
    $region8: #{tpu_custom_call.1} parent=1 // pred_region
      %22 = vsyncadd [#allocation3], 0
      %s23 = sshll.u32 %s1, 4
      %s24 = int_to_ptr.hbm [resolvable:$true] %s23
      %s25 = sshll.u32 [#allocation6], 4
      %s26 = int_to_ptr.vmem [resolvable:$true] %s25
      %31 = dma.hbm_to_vmem [thread:$0]  %s24, 1920, %s26, [#allocation3], 128, 128, 8
    $region9: #{tpu_custom_call.1} parent=1 // pred_fallthru
      _
    // Predicated region
    $region10: #{tpu_custom_call.1} parent=1 // pred_check
      _
    $region11: #{tpu_custom_call.1} parent=1 // pred_check_branch
      %33 = sbr.rel (0) target = $region13
    $region12: #{tpu_custom_call.1} parent=1 // pred_region
      %35 = dma.done [#allocation5], 16
    $region13: #{tpu_custom_call.1} parent=1 // pred_fallthru
      _
    // Predicated region
    $region14: #{tpu_custom_call.1} parent=1 // pred_check
      _
    $region15: #{tpu_custom_call.1} parent=1 // pred_check_branch
      %37 = sbr.rel (0) target = $region17
    $region16: #{tpu_custom_call.1} parent=1 // pred_region
      %39 = dma.done [#allocation3], 1920
    $region17: #{tpu_custom_call.1} parent=1 // pred_fallthru
      _
    %40 = sfence
    %s41 = sld [smem:[#allocation2]]
    %s42 = sld [smem:[#allocation2 + $0x2]]
    %s43 = sld [smem:[#allocation2 + $0x3]]
    %s44 = sld [smem:[#allocation2 + $0x4]]
    %s45 = sld [smem:[#allocation2 + $0x6]]
    %s46 = sld [smem:[#allocation2 + $0x7]]
    %s47 = sld [smem:[#allocation2 + $0x9]]
    %s48 = sld [smem:[#allocation2 + $0xa]]
    %s49 = sld [smem:[#allocation2 + $0xc]]
    %s50 = sld [smem:[#allocation2 + $0xe]]
    %s51 = sld [smem:[#allocation2 + $0xf]]
    %s52 = sld [smem:[#allocation2 + $0x11]]
    %s53 = sld [smem:[#allocation2 + $0x12]]
    %s54 = sld [smem:[#allocation2 + $0x14]]
    %s55 = sld [smem:[#allocation2 + $0x15]]
    %s56 = sld [smem:[#allocation2 + $0x16]]
    %s57 = sld [smem:[#allocation2 + $0x17]]
    %s58 = sld [smem:[#allocation2 + $0x18]]
    %s59 = sld [smem:[#allocation2 + $0x19]]
    %s60 = sld [smem:[#allocation2 + $0x1a]]
    %s61 = sld [smem:[#allocation2 + $0x1b]]
    %s62 = sld [smem:[#allocation2 + $0x1c]]
    %s63 = sld [smem:[#allocation2 + $0x1d]]
    %s64 = sld [smem:[#allocation2 + $0x1e]]
    %s65 = sld [smem:[#allocation2 + $0x1f]]
    %s66 = sld [smem:[#allocation2 + $0x20]]
    %s67 = sld [smem:[#allocation2 + $0x21]]
    %s68 = sld [smem:[#allocation2 + $0x22]]
    %s69 = sld [smem:[#allocation2 + $0x23]]
    %s70 = sld [smem:[#allocation2 + $0x24]]
    %s71 = sld [smem:[#allocation2 + $0x25]]
    %s72 = sld [smem:[#allocation2 + $0x26]]
    %s73 = sld [smem:[#allocation2 + $0x27]]
    %s74 = scalar_lea.vmem [#allocation6], 24
    %v75 = vld [vmem:[%s74] sm:$0xff]
    %s76 = scalar_lea.vmem [#allocation6], 32
    %v77 = vld [vmem:[%s76] sm:$0xff]
    %s78 = scalar_lea.vmem [#allocation6], 40
    %v79 = vld [vmem:[%s78] sm:$0xff]
    %s80 = scalar_lea.vmem [#allocation6], 48
    %v81 = vld [vmem:[%s80] sm:$0xff]
    %s82 = scalar_lea.vmem [#allocation6], 56
    %v83 = vld [vmem:[%s82] sm:$0xff]
    %s84 = scalar_lea.vmem [#allocation6], 64
    %v85 = vld [vmem:[%s84] sm:$0xff]
    %s86 = scalar_lea.vmem [#allocation6], 72
    %v87 = vld [vmem:[%s86] sm:$0xff]
    %s88 = scalar_lea.vmem [#allocation6], 80
    %v89 = vld [vmem:[%s88] sm:$0xff]
    %s90 = scalar_lea.vmem [#allocation6], 88
    %v91 = vld [vmem:[%s90] sm:$0xff]
    %v92 = vmul.f32 %v75, %v75
    %v93 = vmul.f32 %v77, %v77
    %v94 = vadd.f32 %v92, %v93
    %v95 = vmul.f32 %v79, %v79
    %v96 = vadd.f32 %v94, %v95
    %v97 = vmul.f32 %v81, %v81
    %v98 = vmul.f32 %v83, %v83
    %v99 = vadd.f32 %v97, %v98
    %v100 = vmul.f32 %v85, %v85
    %v101 = vadd.f32 %v99, %v100
    %v102 = vmul.f32 %v87, %v87
    %v103 = vmul.f32 %v89, %v89
    %v104 = vadd.f32 %v102, %v103
    %v105 = vmul.f32 %v91, %v91
    %v106 = vadd.f32 %v104, %v105
    %v107 = vmax.f32 %v96, 1e-12
    %v108 = vrsqrt.pop %v107
    %v109 = vmul.f32 %v108, %v107
    %v110 = vmul.f32 %v109, %v108
    %v111 = vmul.f32 0.5, %v110
    %v112 = vsub.f32 1.5, %v111
    %v113 = vmul.f32 %v108, %v112
    %vm114 = vweird.f32 %v107
    %vm115 = vweird.f32 %v108
    %vm116 = vmor %vm114, %vm115
    %v117 = vsel %vm116, %v108, %v113
    %v118 = vmax.f32 %v101, 1e-12
    %v119 = vrsqrt.pop %v118
    %v120 = vmul.f32 %v119, %v118
    %v121 = vmul.f32 %v120, %v119
    %v122 = vmul.f32 0.5, %v121
    %v123 = vsub.f32 1.5, %v122
    %v124 = vmul.f32 %v119, %v123
    %vm125 = vweird.f32 %v118
    %vm126 = vweird.f32 %v119
    %vm127 = vmor %vm125, %vm126
    %v128 = vsel %vm127, %v119, %v124
    %v129 = vmax.f32 %v106, 1e-12
    %v130 = vrsqrt.pop %v129
    %v131 = vmul.f32 %v130, %v129
    %v132 = vmul.f32 %v131, %v130
    %v133 = vmul.f32 0.5, %v132
    %v134 = vsub.f32 1.5, %v133
    %v135 = vmul.f32 %v130, %v134
    %vm136 = vweird.f32 %v129
    %vm137 = vweird.f32 %v130
    %vm138 = vmor %vm136, %vm137
    %v139 = vsel %vm138, %v130, %v135
    %v140 = vmul.f32 %v77, %v85
    %v141 = vmul.f32 %v79, %v83
    %v142 = vsub.f32 %v140, %v141
    %v143 = vmul.f32 %v79, %v81
    %v144 = vmul.f32 %v75, %v85
    %v145 = vsub.f32 %v143, %v144
    %v146 = vmul.f32 %v75, %v83
    %v147 = vmul.f32 %v77, %v81
    %v148 = vsub.f32 %v146, %v147
    %v149 = vmul.f32 %v83, %v91
    %v150 = vmul.f32 %v85, %v89
    %v151 = vsub.f32 %v149, %v150
    %v152 = vmul.f32 %v85, %v87
    %v153 = vmul.f32 %v81, %v91
    %v154 = vsub.f32 %v152, %v153
    %v155 = vmul.f32 %v81, %v89
    %v156 = vmul.f32 %v83, %v87
    %v157 = vsub.f32 %v155, %v156
    %v158 = vmul.f32 %v142, %v142
    %v159 = vmul.f32 %v145, %v145
    %v160 = vadd.f32 %v158, %v159
    %v161 = vmul.f32 %v148, %v148
    %v162 = vadd.f32 %v160, %v161
    %v163 = vmul.f32 %v151, %v151
    %v164 = vmul.f32 %v154, %v154
    %v165 = vadd.f32 %v163, %v164
    %v166 = vmul.f32 %v157, %v157
    %v167 = vadd.f32 %v165, %v166
    %v168 = vmax.f32 %v162, 1e-12
    %v169 = vrsqrt.pop %v168
    %v170 = vmul.f32 %v169, %v168
    %v171 = vmul.f32 %v170, %v169
    %v172 = vmul.f32 0.5, %v171
    %v173 = vsub.f32 1.5, %v172
    %v174 = vmul.f32 %v169, %v173
    %vm175 = vweird.f32 %v168
    %vm176 = vweird.f32 %v169
    %vm177 = vmor %vm175, %vm176
    %v178 = vsel %vm177, %v169, %v174
    %v179 = vmax.f32 %v167, 1e-12
    %v180 = vrsqrt.pop %v179
    %v181 = vmul.f32 %v180, %v179
    %v182 = vmul.f32 %v181, %v180
    %v183 = vmul.f32 0.5, %v182
    %v184 = vsub.f32 1.5, %v183
    %v185 = vmul.f32 %v180, %v184
    %vm186 = vweird.f32 %v179
    %vm187 = vweird.f32 %v180
    %vm188 = vmor %vm186, %vm187
    %v189 = vsel %vm188, %v180, %v185
    %v190 = vmul.f32 %v101, %v128
    %v191 = vstv %s41
    %v192 = vsub.f32 %v190, %v191
    %v193 = vstv %s72
    %v194 = vmul.f32 %v192, %v193
    %v195 = vstv %s42
    %v196 = vmul.f32 %v195, %v194
    %v197 = vmul.f32 %v196, 0.044715
    %v198 = vmul.f32 %v197, %v196
    %v199 = vmul.f32 %v198, %v196
    %v200 = vadd.f32 %v196, %v199
    %v201 = vmul.f32 %v200, 0.7978846
    %v202 = vtanh.pop %v201
    %v203 = vadd.f32 %v202, 1.0
    %v204 = vmul.f32 %v203, 0.5
    %v205 = vmul.f32 %v194, 0.5
    %v206 = vmul.f32 %v205, %v194
    %v207 = vstv %s73
    %v208 = vmul.f32 %v204, %v207
    %v209 = vmax.f32 %v208, 1e-30
    %v210 = vlog2.pop %v209
    %v211 = vmul.f32 %v210, 0.6931472
    %v212 = vsub.f32 %v206, %v211
    %v213 = vmul.f32 %v117, %v128
    %v214 = vmul.f32 %v128, %v139
    %v215 = vmul.f32 %v75, %v81
    %v216 = vmul.f32 %v77, %v83
    %v217 = vadd.f32 %v215, %v216
    %v218 = vmul.f32 %v79, %v85
    %v219 = vadd.f32 %v217, %v218
    %v220 = vsub.f32 0.0, %v219
    %v221 = vmul.f32 %v220, %v213
    %v222 = vmul.f32 %v162, %v178
    %v223 = vmul.f32 %v222, %v213
    %v224 = vmul.f32 %v81, %v87
    %v225 = vmul.f32 %v83, %v89
    %v226 = vadd.f32 %v224, %v225
    %v227 = vmul.f32 %v85, %v91
    %v228 = vadd.f32 %v226, %v227
    %v229 = vsub.f32 0.0, %v228
    %v230 = vmul.f32 %v229, %v214
    %v231 = vmul.f32 %v167, %v189
    %v232 = vmul.f32 %v231, %v214
    %v233 = vstv %s60
    %v234 = vmul.f32 %v221, %v233
    %v235 = vstv %s66
    %v236 = vmul.f32 %v223, %v235
    %v237 = vadd.f32 %v234, %v236
    %v238 = vmul.f32 %v230, %v233
    %v239 = vmul.f32 %v232, %v235
    %v240 = vadd.f32 %v238, %v239
    %s241 = smul.f32 %s43, -2.0
    %v242 = vadd.f32 %v237, %v240
    %v243 = vstv %s44
    %v244 = vmul.f32 %v243, %v242
    %v245 = vstv %s241
    %v246 = vsub.f32 %v245, %v244
    %v247 = vmul.f32 %v178, %v189
    %v248 = vmul.f32 %v142, %v151
    %v249 = vmul.f32 %v145, %v154
    %v250 = vadd.f32 %v248, %v249
    %v251 = vmul.f32 %v148, %v157
    %v252 = vadd.f32 %v250, %v251
    %v253 = vmul.f32 %v252, %v247
    %v254 = vmul.f32 %v145, %v85
    %v255 = vmul.f32 %v148, %v83
    %v256 = vsub.f32 %v254, %v255
    %v257 = vmul.f32 %v148, %v81
    %v258 = vmul.f32 %v142, %v85
    %v259 = vsub.f32 %v257, %v258
    %v260 = vmul.f32 %v142, %v83
    %v261 = vmul.f32 %v145, %v81
    %v262 = vsub.f32 %v260, %v261
    %v263 = vmul.f32 %v256, %v151
    %v264 = vmul.f32 %v259, %v154
    %v265 = vadd.f32 %v263, %v264
    %v266 = vmul.f32 %v262, %v157
    %v267 = vadd.f32 %v265, %v266
    %v268 = vmul.f32 %v128, %v247
    %v269 = vmul.f32 %v267, %v268
    %v270 = vstv %s61
    %v271 = vmul.f32 %v253, %v270
    %v272 = vstv %s67
    %v273 = vmul.f32 %v269, %v272
    %v274 = vadd.f32 %v271, %v273
    %v275 = vstv %s46
    %v276 = vmul.f32 %v275, %v274
    %v277 = vstv %s45
    %v278 = vadd.f32 %v277, %v276
    %v279 = vmul.f32 %v278, 1.442695
    %v280 = vpow.pop %v279
    %v281 = vstv %s62
    %v282 = vmul.f32 %v253, %v281
    %v283 = vstv %s68
    %v284 = vmul.f32 %v269, %v283
    %v285 = vadd.f32 %v282, %v284
    %v286 = vstv %s48
    %v287 = vmul.f32 %v286, %v285
    %v288 = vstv %s47
    %v289 = vadd.f32 %v288, %v287
    %v290 = vmul.f32 %v289, 1.442695
    %v291 = vpow.pop %v290
    %v292 = vadd.f32 %v280, %v291
    %v293 = vmax.f32 %v292, 1e-30
    %v294 = vlog2.pop %v293
    %v295 = vmul.f32 %v294, 0.6931472
    %v296 = vsub.f32 0.0, %v295
    %v297 = vld [vmem:[#allocation6] sm:$0xff]
    %s298 = scalar_lea.vmem [#allocation6], 8
    %v299 = vld [vmem:[%s298] sm:$0xff]
    %s300 = scalar_lea.vmem [#allocation6], 16
    %v301 = vld [vmem:[%s300] sm:$0xff]
    %v302 = vmul.f32 %v299, %v79
    %v303 = vmul.f32 %v301, %v77
    %v304 = vsub.f32 %v302, %v303
    %v305 = vmul.f32 %v301, %v75
    %v306 = vmul.f32 %v297, %v79
    %v307 = vsub.f32 %v305, %v306
    %v308 = vmul.f32 %v297, %v77
    %v309 = vmul.f32 %v299, %v75
    %v310 = vsub.f32 %v308, %v309
    %v311 = vmul.f32 %v304, %v304
    %v312 = vmul.f32 %v307, %v307
    %v313 = vadd.f32 %v311, %v312
    %v314 = vmul.f32 %v310, %v310
    %v315 = vadd.f32 %v313, %v314
    %v316 = vmax.f32 %v315, 1e-12
    %v317 = vrsqrt.pop %v316
    %v318 = vmul.f32 %v317, %v316
    %v319 = vmul.f32 %v318, %v317
    %v320 = vmul.f32 0.5, %v319
    %v321 = vsub.f32 1.5, %v320
    %v322 = vmul.f32 %v317, %v321
    %vm323 = vweird.f32 %v316
    %vm324 = vweird.f32 %v317
    %vm325 = vmor %vm323, %vm324
    %v326 = vsel %vm325, %v317, %v322
    %v327 = vmul.f32 %v326, %v178
    %v328 = vmul.f32 %v304, %v142
    %v329 = vmul.f32 %v307, %v145
    %v330 = vadd.f32 %v328, %v329
    %v331 = vmul.f32 %v310, %v148
    %v332 = vadd.f32 %v330, %v331
    %v333 = vmul.f32 %v332, %v327
    %v334 = vmul.f32 %v307, %v79
    %v335 = vmul.f32 %v310, %v77
    %v336 = vsub.f32 %v334, %v335
    %v337 = vmul.f32 %v310, %v75
    %v338 = vmul.f32 %v304, %v79
    %v339 = vsub.f32 %v337, %v338
    %v340 = vmul.f32 %v304, %v77
    %v341 = vmul.f32 %v307, %v75
    %v342 = vsub.f32 %v340, %v341
    %v343 = vmul.f32 %v336, %v142
    %v344 = vmul.f32 %v339, %v145
    %v345 = vadd.f32 %v343, %v344
    %v346 = vmul.f32 %v342, %v148
    %v347 = vadd.f32 %v345, %v346
    %v348 = vmul.f32 %v117, %v327
    %v349 = vmul.f32 %v347, %v348
    %v350 = vstv %s63
    %v351 = vmul.f32 %v333, %v350
    %v352 = vstv %s69
    %v353 = vmul.f32 %v349, %v352
    %v354 = vadd.f32 %v351, %v353
    %v355 = vstv %s50
    %v356 = vmul.f32 %v355, %v354
    %v357 = vstv %s49
    %v358 = vadd.f32 %v357, %v356
    %v359 = vmul.f32 %v358, 1.442695
    %v360 = vpow.pop %v359
    %v361 = vstv %s64
    %v362 = vmul.f32 %v333, %v361
    %v363 = vstv %s70
    %v364 = vmul.f32 %v349, %v363
    %v365 = vadd.f32 %v362, %v364
    %v366 = vstv %s52
    %v367 = vmul.f32 %v366, %v365
    %v368 = vstv %s51
    %v369 = vadd.f32 %v368, %v367
    %v370 = vmul.f32 %v369, 1.442695
    %v371 = vpow.pop %v370
    %v372 = vstv %s65
    %v373 = vmul.f32 %v333, %v372
    %v374 = vstv %s71
    %v375 = vmul.f32 %v349, %v374
    %v376 = vadd.f32 %v373, %v375
    %v377 = vstv %s54
    %v378 = vmul.f32 %v377, %v376
    %v379 = vstv %s53
    %v380 = vadd.f32 %v379, %v378
    %v381 = vmul.f32 %v380, 1.442695
    %v382 = vpow.pop %v381
    %v383 = vadd.f32 %v360, %v371
    %v384 = vadd.f32 %v383, %v382
    %v385 = vmax.f32 %v384, 1e-30
    %v386 = vlog2.pop %v385
    %v387 = vmul.f32 %v386, 0.6931472
    %v388 = vsub.f32 0.0, %v387
    %s389 = scalar_lea.vmem [#allocation6], 96
    %v390 = vld [vmem:[%s389] sm:$0xff]
    %s391 = scalar_lea.vmem [#allocation6], 104
    %v392 = vld [vmem:[%s391] sm:$0xff]
    %s393 = scalar_lea.vmem [#allocation6], 112
    %v394 = vld [vmem:[%s393] sm:$0xff]
    %v395 = vmul.f32 %v392, %v91
    %v396 = vmul.f32 %v394, %v89
    %v397 = vsub.f32 %v395, %v396
    %v398 = vmul.f32 %v394, %v87
    %v399 = vmul.f32 %v390, %v91
    %v400 = vsub.f32 %v398, %v399
    %v401 = vmul.f32 %v390, %v89
    %v402 = vmul.f32 %v392, %v87
    %v403 = vsub.f32 %v401, %v402
    %v404 = vmul.f32 %v397, %v397
    %v405 = vmul.f32 %v400, %v400
    %v406 = vadd.f32 %v404, %v405
    %v407 = vmul.f32 %v403, %v403
    %v408 = vadd.f32 %v406, %v407
    %v409 = vmax.f32 %v408, 1e-12
    %v410 = vrsqrt.pop %v409
    %v411 = vmul.f32 %v410, %v409
    %v412 = vmul.f32 %v411, %v410
    %v413 = vmul.f32 0.5, %v412
    %v414 = vsub.f32 1.5, %v413
    %v415 = vmul.f32 %v410, %v414
    %vm416 = vweird.f32 %v409
    %vm417 = vweird.f32 %v410
    %vm418 = vmor %vm416, %vm417
    %v419 = vsel %vm418, %v410, %v415
    %v420 = vmul.f32 %v419, %v189
    %v421 = vmul.f32 %v397, %v151
    %v422 = vmul.f32 %v400, %v154
    %v423 = vadd.f32 %v421, %v422
    %v424 = vmul.f32 %v403, %v157
    %v425 = vadd.f32 %v423, %v424
    %v426 = vsub.f32 0.0, %v425
    %v427 = vmul.f32 %v426, %v420
    %v428 = vmul.f32 %v400, %v91
    %v429 = vmul.f32 %v403, %v89
    %v430 = vsub.f32 %v428, %v429
    %v431 = vmul.f32 %v403, %v87
    %v432 = vmul.f32 %v397, %v91
    %v433 = vsub.f32 %v431, %v432
    %v434 = vmul.f32 %v397, %v89
    %v435 = vmul.f32 %v400, %v87
    %v436 = vsub.f32 %v434, %v435
    %v437 = vmul.f32 %v430, %v151
    %v438 = vmul.f32 %v433, %v154
    %v439 = vadd.f32 %v437, %v438
    %v440 = vmul.f32 %v436, %v157
    %v441 = vadd.f32 %v439, %v440
    %v442 = vmul.f32 %v139, %v420
    %v443 = vmul.f32 %v441, %v442
    %v444 = vmul.f32 %v427, %v350
    %v445 = vmul.f32 %v443, %v352
    %v446 = vadd.f32 %v444, %v445
    %v447 = vmul.f32 %v355, %v446
    %v448 = vadd.f32 %v357, %v447
    %v449 = vmul.f32 %v448, 1.442695
    %v450 = vpow.pop %v449
    %v451 = vmul.f32 %v427, %v361
    %v452 = vmul.f32 %v443, %v363
    %v453 = vadd.f32 %v451, %v452
    %v454 = vmul.f32 %v366, %v453
    %v455 = vadd.f32 %v368, %v454
    %v456 = vmul.f32 %v455, 1.442695
    %v457 = vpow.pop %v456
    %v458 = vmul.f32 %v427, %v372
    %v459 = vmul.f32 %v443, %v374
    %v460 = vadd.f32 %v458, %v459
    %v461 = vmul.f32 %v377, %v460
    %v462 = vadd.f32 %v379, %v461
    %v463 = vmul.f32 %v462, 1.442695
    %v464 = vpow.pop %v463
    %v465 = vadd.f32 %v450, %v457
    %v466 = vadd.f32 %v465, %v464
    %v467 = vmax.f32 %v466, 1e-30
    %v468 = vlog2.pop %v467
    %v469 = vmul.f32 %v468, 0.6931472
    %v470 = vsub.f32 0.0, %v469
    %v471 = vadd.f32 %v388, %v470
    %v472 = vstv %s55
    %v473 = vmul.f32 %v472, %v296
    %v474 = vstv %s56
    %v475 = vmul.f32 %v474, %v471
    %v476 = vadd.f32 %v473, %v475
    %v477 = vstv %s57
    %v478 = vmul.f32 %v477, %v246
    %v479 = vadd.f32 %v476, %v478
    %v480 = vstv %s58
    %v481 = vmul.f32 %v480, %v212
    %v482 = vadd.f32 %v479, %v481
    %v483 = vstv %s59
    %v484 = vadd.f32 %v482, %v483
    %485 = vst [vmem:[#allocation7] sm:$0xff] %v484
    // Predicated region
    $region18: #{tpu_custom_call.1} parent=1 // pred_check
      _
    $region19: #{tpu_custom_call.1} parent=1 // pred_check_branch
      %487 = sbr.rel (0) target = $region21
    $region20: #{tpu_custom_call.1} parent=1 // pred_region
      %489 = vsyncadd [#allocation4], 0
      %s491 = sshll.u32 [#allocation7], 4
      %s492 = int_to_ptr.vmem [resolvable:$true] %s491
      %s493 = sshll.u32 %s2, 4
      %s494 = int_to_ptr.hbm [resolvable:$true] %s493
      %496 = dma.vmem_to_hbm [thread:$0]  %s492, 128, %s494, [#allocation4]
    $region21: #{tpu_custom_call.1} parent=1 // pred_fallthru
      _
    // Predicated region
    $region22: #{tpu_custom_call.1} parent=1 // pred_check
      _
    $region23: #{tpu_custom_call.1} parent=1 // pred_check_branch
      %498 = sbr.rel (0) target = $region25
    $region24: #{tpu_custom_call.1} parent=1 // pred_region
      %500 = dma.done [#allocation4], 128
    $region25: #{tpu_custom_call.1} parent=1 // pred_fallthru
      _
    %501 = vsyncpa [#allocation3], 1
    %502 = vsyncpa [#allocation4], 1
    %503 = vsyncpa [#allocation5], 1

</llo_original>
